<compile_context>
chip_gen: v7x
topology: tpu7x:2x2x1
jax: 0.10.0
libtpu: 0.0.40
codegen_flags: <defaults>
</compile_context>

<pallas_src>
import jax
import jax.numpy as jnp
from jax import lax
from jax.experimental import pallas as pl
from jax.experimental.pallas import tpu as pltpu

_TARGET_BLOCK_ELEMS = 3 * 512 * 1024       # ~1.5M elems ≈ 6 MiB f32 out per block
_MAX_LANE_BLOCK = 16 * 1024                # lanes per block cap (multiple of 128)
_VMEM_LIMIT = 48 * 1024 * 1024             # scoped-VMEM bound (fits v5e/v6e/v7x)
_PROBE_ELEMS = 4096                        # elements read by the cheap max probe
_FALLBACK_VMEM_BYTES = 40 * 1024 * 1024    # if one block's double-buffered footprint
                                           # exceeds this, use the XLA fallback


# ----------------------------- block size picking ----------------------------
def _pick_block(total, align, cap):
    """Largest divisor of `total` that is a multiple of `align` and <= `cap`.

    Falls back to the full dimension when `total` is small or not a multiple
    of `align` (a full-extent block is always layout-legal on TPU)."""
    if total <= cap or total % align != 0:
        return total
    blk = (cap // align) * align
    while blk > align and total % blk != 0:
        blk -= align
    return blk


def _pick_blocks(r, l, itemsize):
    # Sublane alignment depends on dtype packing (f32: 8, bf16: 16, u8: 32).
    align_r = 8 * max(1, 4 // itemsize)
    bl = _pick_block(l, 128, _MAX_LANE_BLOCK)
    br = _pick_block(r, align_r, max(align_r, _TARGET_BLOCK_ELEMS // bl))
    if br * bl > 2 * _TARGET_BLOCK_ELEMS:
        # br fell back to the full (unaligned) row extent; re-shrink lanes.
        bl = _pick_block(l, 128, max(128, _TARGET_BLOCK_ELEMS // br))
    # v7x megacore: ensure >= 2 blocks on the parallel grid once the tensor is
    # big enough (>= 2 MiB) that keeping both TensorCores busy matters.
    if (r // br) * (l // bl) == 1 and r * l * itemsize >= (1 << 21):
        if l % 256 == 0:
            bl = l // 2
        elif r % (2 * align_r) == 0:
            br = r // 2
    return br, bl


# ----------------------- fused scale/bias normalize kernel -------------------
def _normalize_kernel(scale_ref, bias_ref, x_ref, o_ref):
    # (br, bl) * (br, 1) - (br, 1): one mul + one sub per element, no divides.
    # The cast happens in-register, so narrow input dtypes (uint8 / bf16) are
    # read from HBM at their native width.
    o_ref[...] = x_ref[...].astype(jnp.float32) * scale_ref[...] - bias_ref[...]


def _normalize_2d(x2d, scale_rows, bias_rows, br, bl, donate):
    r, l = x2d.shape
    nr, nl = r // br, l // bl
    extra = {}
    if donate and x2d.dtype == jnp.float32:
        # Output reuses x's HBM buffer (only meaningful if the caller donates x,
        # e.g. jax.jit(..., donate_argnums=0)).
        extra["input_output_aliases"] = {2: 0}
    return pl.pallas_call(
        _normalize_kernel,
        out_shape=jax.ShapeDtypeStruct((r, l), jnp.float32),
        grid_spec=pltpu.PrefetchScalarGridSpec(
            num_scalar_prefetch=0,
            grid=(nr, nl),
            in_specs=[
                pl.BlockSpec((br, 1), lambda i, j: (i, 0)),    # per-row scale
                pl.BlockSpec((br, 1), lambda i, j: (i, 0)),    # per-row bias
                pl.BlockSpec((br, bl), lambda i, j: (i, j)),   # x (native dtype)
            ],
            out_specs=pl.BlockSpec((br, bl), lambda i, j: (i, j)),
        ),
        compiler_params=pltpu.CompilerParams(
            dimension_semantics=("parallel", "parallel"),
            vmem_limit_bytes=_VMEM_LIMIT,
        ),
        **extra,
    )(scale_rows, bias_rows, x2d)


# ---------------------------------- wrapper ----------------------------------
def normalize(x, mean, std, donate_input=False):
    """Pallas TPU equivalent of the PyTorch `Normalize` module.

    x: (N, 3, H, W) image batch (float32 / bfloat16 / uint8 / ...).
    mean, std: (3,) per-channel statistics.  Returns float32 (N, 3, H, W).
    """
    n, c, h, w = x.shape
    assert mean.shape[0] == c and std.shape[0] == c
    r, l = n * c, h * w
    x2d = x.reshape(r, l)                      # free view of contiguous NCHW

    # ---- Data-dependent /255 divisor (matches `if torch.max(input) > 1`).
    # Early exit: a tiny probe normally decides it (any real [0,255] image has
    # a pixel > 1 almost immediately), so the common case never streams the
    # whole tensor for the max.  Only when the probe is inconclusive does
    # lax.cond run XLA's full max-reduce (already at HBM roofline).
    probe_max = jnp.max(x.reshape(-1)[:_PROBE_ELEMS])
    d = lax.cond(
        probe_max > 1,
        lambda: jnp.float32(255.0),
        lambda: jnp.where(jnp.max(x2d) > 1, jnp.float32(255.0), jnp.float32(1.0)),
    )

    # ---- Fold divisor + mean/std into per-channel scale/bias, expanded to
    # per-row (N*C, 1) f32 vectors; row k is channel k % C of image k // C.
    mean_f = mean.astype(jnp.float32)
    std_f = std.astype(jnp.float32)
    scale_rows = jnp.tile(1.0 / (d * std_f), n).reshape(r, 1)
    bias_rows = jnp.tile(mean_f / std_f, n).reshape(r, 1)

    # ---- Fused normalize pass.
    itemsize = jnp.dtype(x.dtype).itemsize
    br, bl = _pick_blocks(r, l, itemsize)
    if 2 * br * bl * (itemsize + 4) > _FALLBACK_VMEM_BYTES:
        # Pathologically unaligned huge shape: a single full-extent block would
        # blow VMEM.  TODO(synk): add masked-tail BlockSpecs instead of this
        # plain-XLA fallback.
        out2d = x2d.astype(jnp.float32) * scale_rows - bias_rows
    else:
        out2d = _normalize_2d(x2d, scale_rows, bias_rows, br, bl, donate_input)
    return out2d.reshape(n, c, h, w)


if __name__ == "__main__":
    key = jax.random.PRNGKey(0)
    n, c, h, w = 2, 3, 16, 16   # Normalize hard-codes 3 channels (mean/std are (3,))

    # CLIP/ImageNet-style normalization constants.
    mean = jnp.array([0.485, 0.456, 0.406], dtype=jnp.float32)
    std = jnp.array([0.229, 0.224, 0.225], dtype=jnp.float32)

    fn = jax.jit(normalize)

    def reference(x):
        xf = x.astype(jnp.float32)
        xr = jnp.where(jnp.max(xf) > 1.0, xf / 255.0, xf)
        return (xr - mean.reshape(1, 3, 1, 1)) / std.reshape(1, 3, 1, 1)

    k1, _ = jax.random.split(key)

    # Case 1: f32 in [0, 255] -> /255 branch, decided by the cheap probe.
    x_255 = jax.random.uniform(k1, (n, c, h, w), dtype=jnp.float32,
                               minval=0.0, maxval=255.0)
    out_255 = jax.block_until_ready(fn(x_255, mean, std))
    assert out_255.shape == (n, c, h, w) and out_255.dtype == jnp.float32
    assert jnp.allclose(out_255, reference(x_255), atol=1e-5, rtol=1e-5)

    # Case 2: f32 in [0, 1] -> probe inconclusive, full max says no /255.
    x_unit = x_255 / 300.0
    out_unit = jax.block_until_ready(fn(x_unit, mean, std))
    assert jnp.allclose(out_unit, reference(x_unit), atol=1e-5, rtol=1e-5)

    # Case 3: bfloat16 input -> kernel reads the narrow dtype, casts in-register.
    x_bf16 = x_255.astype(jnp.bfloat16)
    out_bf16 = jax.block_until_ready(fn(x_bf16, mean, std))
    assert out_bf16.dtype == jnp.float32
    assert jnp.allclose(out_bf16, reference(x_bf16), atol=1e-5, rtol=1e-5)

    print("KERNEL_OK")
</pallas_src>

<mosaic_0001>
module attributes {stable_mosaic.version = 11 : i64} {
  func.func @_normalize_kernel(%arg0: i32, %arg1: i32, %arg2: memref<6x1xf32, #tpu.memory_space<vmem>>, %arg3: memref<6x1xf32, #tpu.memory_space<vmem>>, %arg4: memref<6x256xf32, #tpu.memory_space<vmem>>, %arg5: memref<6x256xf32, #tpu.memory_space<vmem>>) attributes {dimension_semantics = [#tpu.dimension_semantics<parallel>, #tpu.dimension_semantics<parallel>], iteration_bounds = array<i64: 1, 1>, scalar_prefetch = 0 : i64, scratch_operands = 0 : i64, tpu.core_type = #tpu.core_type<tc>, window_params = [{transform_indices = @transform_0, window_bounds = array<i64: 6, 1>}, {transform_indices = @transform_1, window_bounds = array<i64: 6, 1>}, {transform_indices = @transform_2, window_bounds = array<i64: 6, 256>}, {transform_indices = @transform_3, window_bounds = array<i64: 6, 256>}]} {
    %c0 = arith.constant 0 : index
    %c0_0 = arith.constant 0 : index
    %0 = vector.load %arg4[%c0, %c0_0] : memref<6x256xf32, #tpu.memory_space<vmem>>, vector<6x256xf32>
    %c0_1 = arith.constant 0 : index
    %c0_2 = arith.constant 0 : index
    %1 = vector.load %arg2[%c0_1, %c0_2] : memref<6x1xf32, #tpu.memory_space<vmem>>, vector<6x1xf32>
    %2 = vector.broadcast %1 : vector<6x1xf32> to vector<6x256xf32>
    %3 = arith.mulf %0, %2 : vector<6x256xf32>
    %c0_3 = arith.constant 0 : index
    %c0_4 = arith.constant 0 : index
    %4 = vector.load %arg3[%c0_3, %c0_4] : memref<6x1xf32, #tpu.memory_space<vmem>>, vector<6x1xf32>
    %5 = vector.broadcast %4 : vector<6x1xf32> to vector<6x256xf32>
    %6 = arith.subf %3, %5 : vector<6x256xf32>
    %c0_5 = arith.constant 0 : index
    %c0_6 = arith.constant 0 : index
    %7 = vector.load %arg5[%c0_5, %c0_6] : memref<6x256xf32, #tpu.memory_space<vmem>>, vector<6x256xf32>
    tpu.vector_store %arg5[%c0_5, %c0_6], %6 {strides = array<i32>} : memref<6x256xf32, #tpu.memory_space<vmem>>, vector<6x256xf32>,
    return
  }
  func.func @transform_0(%arg0: i32, %arg1: i32) -> (i32, i32) {
    %c0_i32 = arith.constant 0 : i32
    %c0_i32_0 = arith.constant 0 : i32
    return %arg0, %c0_i32 : i32, i32
  }
  func.func @transform_1(%arg0: i32, %arg1: i32) -> (i32, i32) {
    %c0_i32 = arith.constant 0 : i32
    %c0_i32_0 = arith.constant 0 : i32
    return %arg0, %c0_i32 : i32, i32
  }
  func.func @transform_2(%arg0: i32, %arg1: i32) -> (i32, i32) {
    %c0_i32 = arith.constant 0 : i32
    return %arg0, %arg1 : i32, i32
  }
  func.func @transform_3(%arg0: i32, %arg1: i32) -> (i32, i32) {
    %c0_i32 = arith.constant 0 : i32
    return %arg0, %arg1 : i32, i32
  }
}

</mosaic_0001>

<llo_original>
// kernel: mul.0
$region0: #{mul.0}
  #allocation2 [shape = 's32[1]{0}', space=sflag, size = 0x4, scoped, tag = 'scoped memory for mul.0']
  %s0 = inlined_call_operand.<no memory space> [shape: f32[], index: 0, kind: input, shape index: {}]
  %s1 = inlined_call_operand.hbm [shape: f32[3], index: 1, kind: output, shape index: {}]
  %v2 = vstv %s0
  $region1: #{mul.0} parent=0
    #allocation0 [shape = 'u8[512]{0}', space=vmem, size = 0x400, scoped, tag = 'operand span for operand 1']
    #allocation1 [shape = 's32[1]{0}', space=sflag, size = 0x4, scoped, tag = 'scoped memory for mul.0']
    %3 = vsyncpa [#allocation1], 0
    %4 = vst [vmem:[#allocation0] sm:$0x1] %v2
    %s6 = ssub.s32 16, 16
    %7 = vsyncadd [#allocation1], %s6
    %s9 = sshll.u32 [#allocation0], 4
    %s10 = int_to_ptr.vmem [resolvable:$true] %s9
    %12 = dma.vmem_to_hbm [thread:$0]  %s10, 16, %s1, [#allocation1]
    %13 = dma.done [#allocation1], 16
    %14 = vsyncpa [#allocation1], 1

// kernel: mul.1
$region0: #{mul.1}
  #allocation2 [shape = 's32[1]{0}', space=sflag, size = 0x4, scoped, tag = 'scoped memory for mul.1']
  %s0 = inlined_call_operand.<no memory space> [shape: f32[], index: 0, kind: input, shape index: {}]
  %s1 = inlined_call_operand.hbm [shape: f32[3], index: 1, kind: output, shape index: {}]
  %v2 = vstv %s0
  $region1: #{mul.1} parent=0
    #allocation0 [shape = 'u8[512]{0}', space=vmem, size = 0x400, scoped, tag = 'operand span for operand 1']
    #allocation1 [shape = 's32[1]{0}', space=sflag, size = 0x4, scoped, tag = 'scoped memory for mul.1']
    %3 = vsyncpa [#allocation1], 0
    %4 = vst [vmem:[#allocation0] sm:$0x1] %v2
    %s6 = ssub.s32 16, 16
    %7 = vsyncadd [#allocation1], %s6
    %s9 = sshll.u32 [#allocation0], 4
    %s10 = int_to_ptr.vmem [resolvable:$true] %s9
    %12 = dma.vmem_to_hbm [thread:$0]  %s10, 16, %s1, [#allocation1]
    %13 = dma.done [#allocation1], 16
    %14 = vsyncpa [#allocation1], 1

// kernel: tile.18
$region0: #{tile.18}
  #allocation0 [shape = 's32[1]{0}', space=sflag, size = 0x4, scoped, tag = 'scoped memory for tile.18']
  %s0 = inlined_call_operand.vmem [shape: f32[3], index: 0, kind: input, shape index: {}]
  %s1 = inlined_call_operand.vmem [shape: f32[2,3], index: 1, kind: output, shape index: {}]
  // Predicated region
  $region2: #{tile.18} parent=0 // pred_check
    _
  $region3: #{tile.18} parent=0 // pred_check_branch
    %3 = sbr.rel (0) target = $region5
  $region4: #{tile.18} parent=0 // pred_region
    _
  $region5: #{tile.18} parent=0 // pred_fallthru
    _
  %v4 = vld [vmem:[%s0] ss:$0 sm:$0xff]
  %5 = vst [vmem:[%s1] sm:$0x3] %v4

// kernel: tile.0
$region0: #{tile.0}
  %s0 = inlined_call_operand.vmem [shape: f32[2,3], index: 0, kind: input, shape index: {}]
  %s1 = inlined_call_operand.vmem [shape: f32[6,1], index: 1, kind: output, shape index: {}]
  $region1: #{tile.0} parent=0
    #allocation0 [shape = 'u8[4096]{0}', space=vmem, size = 0x1000, scoped, tag = 'scoped mem for input reshape']
    %s3 = sshllo.u32 0, 2
    %v4 = vld [vmem:[%s0] sm:%s3]
    %5 = vst [vmem:[#allocation0] sm:%s3] %v4
    %v6 = vld [vmem:[#allocation0] sm:$0x3]
    %vm7 = vcmask 7168
    %8 = vst.msk [vmem:[%s1] ss:$3 sm:$0x3] %vm7, %v6
    %v9 = vld [vmem:[#allocation0] sm:$0x3]
    %10 = vrot.lane.b32.xlu0 %v9, 127
    %v11 = vpop.permute.xlu0 %10
    %vm12 = vcmask 7168
    %s13 = scalar_lea.vmem %s1, 1
    %14 = vst.msk [vmem:[%s13] ss:$3 sm:$0x3] %vm12, %v11
    %v15 = vld [vmem:[#allocation0] sm:$0x3]
    %16 = vrot.lane.b32.xlu0 %v15, 126
    %v17 = vpop.permute.xlu0 %16
    %vm18 = vcmask 7168
    %s19 = scalar_lea.vmem %s1, 2
    %20 = vst.msk [vmem:[%s19] ss:$3 sm:$0x3] %vm18, %v17

// kernel: normalize.1
$region0: #{normalize.1}
  #allocation0 [shape = 'u32[]', space=smem, size = 0x4, offset = 0x4, fixed_abs, tag = 'smem constant byte address 0x4 - core index']
  #allocation1 [shape = 'u32[144,128]{1,0:T(1,128)}', space=vmem, size = 0x12000, scoped, tag = 'internal scratch']
  %s0 = inlined_call_operand.vmem [shape: f32[6,1], index: 0, kind: input, shape index: {}]
  %s1 = inlined_call_operand.vmem [shape: f32[6,1], index: 1, kind: input, shape index: {}]
  %s2 = inlined_call_operand.hbm [shape: f32[6,256], index: 2, kind: input, shape index: {}]
  %s3 = inlined_call_operand.vmem [shape: f32[6,256], index: 3, kind: output, shape index: {}]
  %s4 = sld [smem:[#allocation0]]
  $region26: #{normalize.1} parent=0
    _
  %s6 = ssub.s32 1, %s4
  %s7 = scalar_select 0, %s6, %s4
  $region1: #{normalize.1} parent=0
    #allocation2 [shape = 'u8[8192]{0}', space=vmem, size = 0x2000, scoped, tag = 'input window, operand 2, single buffered']
    #allocation3 [shape = 's32[1]{0}', space=sflag, size = 0x4, scoped, tag = 'scoped memory for normalize.1']
    %8 = vsyncpa [#allocation3], 0
    // Predicated region
    $region2: #{normalize.1} parent=1 // pred_check
      _
    $region3: #{normalize.1} parent=1 // pred_check_branch
      %10 = sbr.rel (0) target = $region5
    $region4: #{normalize.1} parent=1 // pred_region
      _
    $region5: #{normalize.1} parent=1 // pred_fallthru
      _
    // Predicated region
    $region6: #{normalize.1} parent=1 // pred_check
      _
    $region7: #{normalize.1} parent=1 // pred_check_branch
      %12 = sbr.rel (0) target = $region9
    $region8: #{normalize.1} parent=1 // pred_region
      _
    $region9: #{normalize.1} parent=1 // pred_fallthru
      _
    // Predicated region
    $region10: #{normalize.1} parent=1 // pred_check
      _
    $region11: #{normalize.1} parent=1 // pred_check_branch
      %14 = sbr.rel (0) target = $region13
    $region12: #{normalize.1} parent=1 // pred_region
      %s16 = ssub.s32 256, 256
      %17 = vsyncadd [#allocation3], %s16
      %s19 = sshll.u32 [#allocation2], 4
      %s20 = int_to_ptr.vmem [resolvable:$true] %s19
      %22 = dma.hbm_to_vmem [thread:$0]  %s2, 256, %s20, [#allocation3]
    $region13: #{normalize.1} parent=1 // pred_fallthru
      _
    // Predicated region
    $region14: #{normalize.1} parent=1 // pred_check
      _
    $region15: #{normalize.1} parent=1 // pred_check_branch
      %24 = sbr.rel (0) target = $region17
    $region16: #{normalize.1} parent=1 // pred_region
      %25 = dma.done [#allocation3], 256
    $region17: #{normalize.1} parent=1 // pred_fallthru
      _
    %v26 = vld [vmem:[#allocation2] sm:$0x3f]
    %v27 = vld [vmem:[#allocation2 + $0x8] sm:$0x3f]
    %v28 = vld [vmem:[%s0] sm:$0x3f]
    %30 = vset.pattern.permute.xlu0 0
    %31 = vperm.xlu0 %30, %v28
    %v32 = vpop.permute.xlu0 %31
    %v34 = vmul.f32 %v26, %v32
    %v35 = vmul.f32 %v27, %v32
    %v36 = vld [vmem:[%s1] sm:$0x3f]
    %38 = vset.pattern.permute.xlu0 0
    %39 = vperm.xlu0 %38, %v36
    %v40 = vpop.permute.xlu0 %39
    %v42 = vsub.f32 %v34, %v40
    %v43 = vsub.f32 %v35, %v40
    %44 = vst [vmem:[%s3] sm:$0x3f] %v42
    %45 = vst [vmem:[%s3 + $0x8] sm:$0x3f] %v43
    // Predicated region
    $region18: #{normalize.1} parent=1 // pred_check
      _
    $region19: #{normalize.1} parent=1 // pred_check_branch
      %47 = sbr.rel (0) target = $region21
    $region20: #{normalize.1} parent=1 // pred_region
      _
    $region21: #{normalize.1} parent=1 // pred_fallthru
      _
    // Predicated region
    $region22: #{normalize.1} parent=1 // pred_check
      _
    $region23: #{normalize.1} parent=1 // pred_check_branch
      %49 = sbr.rel (0) target = $region25
    $region24: #{normalize.1} parent=1 // pred_region
      _
    $region25: #{normalize.1} parent=1 // pred_fallthru
      _
    %50 = vsyncpa [#allocation3], 1

</llo_original>
